<compile_context>
chip_gen: v7x
topology: tpu7x:2x2x1
jax: 0.10.0
libtpu: 0.0.40
codegen_flags: <defaults>
</compile_context>

<pallas_src>
import jax
import jax.numpy as jnp
from jax.experimental import pallas as pl
from jax.experimental.pallas import tpu as pltpu


def _round_up(x, m):
    return ((x + m - 1) // m) * m


# ----------------------------- kernels --------------------------------------

def _time_proj_kernel(te_ref, wt_ref, bt_ref, t_ref):
    # te_ref: (btile, 1, T)   time embeddings for this batch tile
    # wt_ref: (T, Din_p)      time_mlp weight (pre-transposed, col-padded)
    # bt_ref: (1, Din_p)      time_mlp bias
    # t_ref:  (btile, 1, Din_p)
    te = te_ref[...][:, 0, :]                                        # (btile, T)
    t = jnp.dot(te, wt_ref[...], preferred_element_type=jnp.float32) + bt_ref[...]
    t_ref[...] = t[:, None, :].astype(t_ref.dtype)


def _block_kernel_with_time(x_ref, t_ref, wo_ref, bo_ref, o_ref):
    # x_ref: (btile, S, Din_p)   input tile (several batch elements)
    # t_ref: (btile, 1, Din_p)   precomputed time projection rows
    # wo_ref: (Din_p, Dout_p)    out_proj weight (resident across grid steps)
    # bo_ref: (1, Dout_p)        out_proj bias
    # o_ref: (btile, S, Dout_p)
    btile, s, dinp = x_ref.shape
    doutp = o_ref.shape[-1]
    h = jnp.maximum(x_ref[...] + t_ref[...], 0.0)                    # fused bcast add + ReLU
    # Collapse (btile, S) -> rows so the MXU sees one big (btile*S, Din) matmul.
    # (Layout-trivial when S is a multiple of 8.)
    h2 = h.reshape(btile * s, dinp)
    out = jnp.dot(h2, wo_ref[...], preferred_element_type=jnp.float32) + bo_ref[...]
    o_ref[...] = out.reshape(btile, s, doutp).astype(o_ref.dtype)


def _block_kernel_no_time(x_ref, wo_ref, bo_ref, o_ref):
    btile, s, dinp = x_ref.shape
    doutp = o_ref.shape[-1]
    h = jnp.maximum(x_ref[...], 0.0)
    h2 = h.reshape(btile * s, dinp)
    out = jnp.dot(h2, wo_ref[...], preferred_element_type=jnp.float32) + bo_ref[...]
    o_ref[...] = out.reshape(btile, s, doutp).astype(o_ref.dtype)


# ----------------------------- wrapper ---------------------------------------

def block_forward(params, x, time_emb=None, *, target_rows=512,
                  vmem_budget_bytes=20 * 1024 * 1024):
    """Pallas forward pass matching Block.forward.

    params: dict with (optionally) 'wt' (T, Din), 'bt' (Din,), and
            'wo' (Din, Dout), 'bo' (Dout,).  Weights are (in, out).
    x: (B, S, Din) float32
    time_emb: (B, T) float32 or None
    """
    B, S, Din = x.shape
    Dout = params["wo"].shape[1]
    dtype = x.dtype

    # Lane-dense feature dims (no-op when already multiples of 128).
    Din_p = _round_up(Din, 128)
    Dout_p = _round_up(Dout, 128)

    # Choose how many batch elements per grid step: aim for ~target_rows rows
    # feeding the MXU, while staying under a conservative VMEM budget
    # (double-buffered x/out/t blocks + resident weights).
    def _fits(bt):
        per_buf = bt * S * (Din_p + Dout_p) * 4 + bt * Din_p * 4
        weights = Din_p * Dout_p * 4 + Dout_p * 4
        return 2 * per_buf + 2 * weights <= vmem_budget_bytes

    btile = max(1, min(B, -(-target_rows // S)))
    while btile > 1 and not _fits(btile):
        btile //= 2

    Bp = _round_up(B, btile)
    grid = (Bp // btile,)

    # Pad inputs (zero padding keeps the math exact; padded rows/cols sliced off).
    xp = x
    if Din_p != Din or Bp != B:
        xp = jnp.pad(x, ((0, Bp - B), (0, 0), (0, Din_p - Din)))
    wo = params["wo"]
    bo = params["bo"]
    if Din_p != Din or Dout_p != Dout:
        wo = jnp.pad(wo, ((0, Din_p - Din), (0, Dout_p - Dout)))
    if Dout_p != Dout:
        bo = jnp.pad(bo, (0, Dout_p - Dout))
    bo = bo.reshape(1, Dout_p)

    cparams = pltpu.CompilerParams(
        dimension_semantics=("parallel",),
        vmem_limit_bytes=32 * 1024 * 1024,
    )

    if time_emb is not None:
        T = time_emb.shape[1]
        wt = params["wt"]
        bt_bias = params["bt"]
        if Din_p != Din:
            wt = jnp.pad(wt, ((0, 0), (0, Din_p - Din)))
            bt_bias = jnp.pad(bt_bias, (0, Din_p - Din))
        bt_bias = bt_bias.reshape(1, Din_p)
        te = time_emb
        if Bp != B:
            te = jnp.pad(time_emb, ((0, Bp - B), (0, 0)))
        te3 = te.reshape(Bp, 1, T)

        # One-shot prologue: t = time_emb @ wt + bt, computed once per batch row.
        t3 = pl.pallas_call(
            _time_proj_kernel,
            out_shape=jax.ShapeDtypeStruct((Bp, 1, Din_p), dtype),
            grid=grid,
            in_specs=[
                pl.BlockSpec((btile, 1, T), lambda i: (i, 0, 0)),
                pl.BlockSpec((T, Din_p), lambda i: (0, 0)),
                pl.BlockSpec((1, Din_p), lambda i: (0, 0)),
            ],
            out_specs=pl.BlockSpec((btile, 1, Din_p), lambda i: (i, 0, 0)),
            compiler_params=cparams,
        )(te3, wt, bt_bias)

        out = pl.pallas_call(
            _block_kernel_with_time,
            out_shape=jax.ShapeDtypeStruct((Bp, S, Dout_p), dtype),
            grid=grid,
            in_specs=[
                pl.BlockSpec((btile, S, Din_p), lambda i: (i, 0, 0)),
                pl.BlockSpec((btile, 1, Din_p), lambda i: (i, 0, 0)),
                pl.BlockSpec((Din_p, Dout_p), lambda i: (0, 0)),
                pl.BlockSpec((1, Dout_p), lambda i: (0, 0)),
            ],
            out_specs=pl.BlockSpec((btile, S, Dout_p), lambda i: (i, 0, 0)),
            compiler_params=cparams,
        )(xp, t3, wo, bo)
    else:
        out = pl.pallas_call(
            _block_kernel_no_time,
            out_shape=jax.ShapeDtypeStruct((Bp, S, Dout_p), dtype),
            grid=grid,
            in_specs=[
                pl.BlockSpec((btile, S, Din_p), lambda i: (i, 0, 0)),
                pl.BlockSpec((Din_p, Dout_p), lambda i: (0, 0)),
                pl.BlockSpec((1, Dout_p), lambda i: (0, 0)),
            ],
            out_specs=pl.BlockSpec((btile, S, Dout_p), lambda i: (i, 0, 0)),
            compiler_params=cparams,
        )(xp, wo, bo)

    if Bp != B or Dout_p != Dout:
        out = out[:B, :, :Dout]
    return out


# ----------------------------- params / reference ----------------------------

def init_params(key, dim_in, dim_out, time_emb_dim):
    """Deterministic synthetic init (PyTorch-Linear-style uniform bounds)."""
    k1, k2, k3, k4 = jax.random.split(key, 4)
    bt_bound = 1.0 / jnp.sqrt(time_emb_dim)
    bo_bound = 1.0 / jnp.sqrt(dim_in)
    return {
        # stored pre-transposed: (in, out)
        "wt": jax.random.uniform(k1, (time_emb_dim, dim_in),
                                 minval=-bt_bound, maxval=bt_bound,
                                 dtype=jnp.float32),
        "bt": jax.random.uniform(k2, (dim_in,), minval=-bt_bound,
                                 maxval=bt_bound, dtype=jnp.float32),
        "wo": jax.random.uniform(k3, (dim_in, dim_out),
                                 minval=-bo_bound, maxval=bo_bound,
                                 dtype=jnp.float32),
        "bo": jax.random.uniform(k4, (dim_out,), minval=-bo_bound,
                                 maxval=bo_bound, dtype=jnp.float32),
    }


def _reference(params, x, time_emb=None):
    # Pure-JAX reference of Block.forward for verification.
    if time_emb is not None:
        t = time_emb @ params["wt"] + params["bt"]
        h = x + t[:, None, :]
    else:
        h = x
    return jnp.maximum(h, 0.0) @ params["wo"] + params["bo"]


if __name__ == "__main__":
    B, S = 2, 8
    dim_in, dim_out, time_emb_dim = 32, 32, 16

    key = jax.random.PRNGKey(0)
    kp, kx, kt = jax.random.split(key, 3)
    params = init_params(kp, dim_in, dim_out, time_emb_dim)
    x = jax.random.normal(kx, (B, S, dim_in), dtype=jnp.float32)
    time_emb = jax.random.normal(kt, (B, time_emb_dim), dtype=jnp.float32)

    # With time embedding (main path).
    out = block_forward(params, x, time_emb)
    out = jax.block_until_ready(out)
    ref = _reference(params, x, time_emb)
    assert out.shape == (B, S, dim_out)
    assert jnp.allclose(out, ref, atol=1e-4, rtol=1e-4)

    # Without time embedding (else branch).
    out2 = block_forward(params, x, None)
    out2 = jax.block_until_ready(out2)
    ref2 = _reference(params, x, None)
    assert out2.shape == (B, S, dim_out)
    assert jnp.allclose(out2, ref2, atol=1e-4, rtol=1e-4)

    print("KERNEL_OK")
</pallas_src>

<mosaic_0001>
module attributes {stable_mosaic.version = 11 : i64} {
  func.func @_time_proj_kernel(%arg0: i32, %arg1: memref<2x1x16xf32, #tpu.memory_space<vmem>>, %arg2: memref<16x128xf32, #tpu.memory_space<vmem>>, %arg3: memref<1x128xf32, #tpu.memory_space<vmem>>, %arg4: memref<2x1x128xf32, #tpu.memory_space<vmem>>) attributes {dimension_semantics = [#tpu.dimension_semantics<parallel>], iteration_bounds = array<i64: 1>, scalar_prefetch = 0 : i64, scratch_operands = 0 : i64, tpu.core_type = #tpu.core_type<tc>, window_params = [{transform_indices = @transform_0, window_bounds = array<i64: 2, 1, 16>}, {pipeline_mode = #tpu.pipeline_mode<synchronous>, transform_indices = @transform_1, window_bounds = array<i64: 16, 128>}, {pipeline_mode = #tpu.pipeline_mode<synchronous>, transform_indices = @transform_2, window_bounds = array<i64: 1, 128>}, {transform_indices = @transform_3, window_bounds = array<i64: 2, 1, 128>}]} {
    %c0 = arith.constant 0 : index
    %c0_0 = arith.constant 0 : index
    %c0_1 = arith.constant 0 : index
    %0 = vector.load %arg1[%c0, %c0_0, %c0_1] : memref<2x1x16xf32, #tpu.memory_space<vmem>>, vector<2x1x16xf32>
    %1 = vector.shape_cast %0 : vector<2x1x16xf32> to vector<2x16xf32>
    %c0_2 = arith.constant 0 : index
    %c0_3 = arith.constant 0 : index
    %2 = vector.load %arg2[%c0_2, %c0_3] : memref<16x128xf32, #tpu.memory_space<vmem>>, vector<16x128xf32>
    %cst = arith.constant dense<0.000000e+00> : vector<2x128xf32>
    %3 = tpu.matmul %1, %2, %cst {dimension_numbers = #tpu.dot_dimension_numbers<[1], [0], [0], [1], [0, 0, 1, 1], [], []>} : vector<2x16xf32>, vector<16x128xf32>, vector<2x128xf32> -> vector<2x128xf32>
    %c0_4 = arith.constant 0 : index
    %c0_5 = arith.constant 0 : index
    %4 = vector.load %arg3[%c0_4, %c0_5] : memref<1x128xf32, #tpu.memory_space<vmem>>, vector<1x128xf32>
    %5 = vector.broadcast %4 : vector<1x128xf32> to vector<2x128xf32>
    %6 = arith.addf %3, %5 : vector<2x128xf32>
    %7 = vector.shape_cast %6 : vector<2x128xf32> to vector<2x1x128xf32>
    %c0_6 = arith.constant 0 : index
    %c0_7 = arith.constant 0 : index
    %c0_8 = arith.constant 0 : index
    %8 = vector.load %arg4[%c0_6, %c0_7, %c0_8] : memref<2x1x128xf32, #tpu.memory_space<vmem>>, vector<2x1x128xf32>
    tpu.vector_store %arg4[%c0_6, %c0_7, %c0_8], %7 {strides = array<i32>} : memref<2x1x128xf32, #tpu.memory_space<vmem>>, vector<2x1x128xf32>,
    return
  }
  func.func @transform_0(%arg0: i32) -> (i32, i32, i32) {
    %c0_i32 = arith.constant 0 : i32
    %c0_i32_0 = arith.constant 0 : i32
    %c0_i32_1 = arith.constant 0 : i32
    return %arg0, %c0_i32, %c0_i32_0 : i32, i32, i32
  }
  func.func @transform_1(%arg0: i32) -> (i32, i32) {
    %c0_i32 = arith.constant 0 : i32
    %c0_i32_0 = arith.constant 0 : i32
    %c0_i32_1 = arith.constant 0 : i32
    return %c0_i32, %c0_i32_0 : i32, i32
  }
  func.func @transform_2(%arg0: i32) -> (i32, i32) {
    %c0_i32 = arith.constant 0 : i32
    %c0_i32_0 = arith.constant 0 : i32
    %c0_i32_1 = arith.constant 0 : i32
    return %c0_i32, %c0_i32_0 : i32, i32
  }
  func.func @transform_3(%arg0: i32) -> (i32, i32, i32) {
    %c0_i32 = arith.constant 0 : i32
    %c0_i32_0 = arith.constant 0 : i32
    %c0_i32_1 = arith.constant 0 : i32
    return %arg0, %c0_i32, %c0_i32_0 : i32, i32, i32
  }
}

</mosaic_0001>

<llo_original>
// kernel: tpu_custom_call.1
$region0: #{tpu_custom_call.1}
  #allocation0 [shape = 'u32[]', space=smem, size = 0x4, offset = 0x4, fixed_abs, tag = 'smem constant byte address 0x4 - core index']
  #allocation1 [shape = 'u32[144,128]{1,0:T(1,128)}', space=vmem, size = 0x12000, scoped, tag = 'internal scratch']
  %s0 = inlined_call_operand.hbm [shape: f32[2,1,16], index: 0, kind: input, shape index: {}]
  %s1 = inlined_call_operand.hbm [shape: f32[16,128], index: 1, kind: input, shape index: {}]
  %s2 = inlined_call_operand.vmem [shape: f32[1,128], index: 2, kind: input, shape index: {}]
  %s3 = inlined_call_operand.hbm [shape: f32[2,1,128], index: 3, kind: output, shape index: {}]
  %s4 = sld [smem:[#allocation0]]
  $region30: #{tpu_custom_call.1} parent=0
    _
  %s6 = ssub.s32 1, %s4
  %s7 = scalar_select 0, %s6, %s4
  $region1: #{tpu_custom_call.1} parent=0
    #allocation2 [shape = 'u8[1024]{0}', space=vmem, size = 0x400, scoped, tag = 'input window, operand 0, single buffered']
    #allocation3 [shape = 's32[1]{0}', space=sflag, size = 0x4, scoped, tag = 'scoped memory for tpu_custom_call.1']
    #allocation4 [shape = 's32[1]{0}', space=sflag, size = 0x4, scoped, tag = 'scoped memory for tpu_custom_call.1']
    #allocation5 [shape = 'u8[8192]{0}', space=vmem, size = 0x2000, scoped, tag = 'input window, operand 1, single buffered']
    #allocation6 [shape = 's32[1]{0}', space=sflag, size = 0x4, scoped, tag = 'scoped memory for tpu_custom_call.1']
    #allocation7 [shape = 'u8[1024]{0}', space=vmem, size = 0x400, scoped, tag = 'output window, operand 0, single buffered']
    %8 = vsyncpa [#allocation3], 0
    %9 = vsyncpa [#allocation6], 0
    %10 = vsyncpa [#allocation4], 0
    // Predicated region
    $region2: #{tpu_custom_call.1} parent=1 // pred_check
      _
    $region3: #{tpu_custom_call.1} parent=1 // pred_check_branch
      %12 = sbr.rel (0) target = $region5
    $region4: #{tpu_custom_call.1} parent=1 // pred_region
      %s14 = ssub.s32 32, 32
      %15 = vsyncadd [#allocation3], %s14
      %s16 = sshll.u32 [#allocation2], 4
      %s17 = int_to_ptr.vmem [resolvable:$true] %s16
      %22 = dma.hbm_to_vmem [thread:$0]  %s0, 32, %s17, [#allocation3], 16, 16, 1
    $region5: #{tpu_custom_call.1} parent=1 // pred_fallthru
      _
    // Predicated region
    $region6: #{tpu_custom_call.1} parent=1 // pred_check
      _
    $region7: #{tpu_custom_call.1} parent=1 // pred_check_branch
      %24 = sbr.rel (0) target = $region9
    $region8: #{tpu_custom_call.1} parent=1 // pred_region
      %s26 = ssub.s32 256, 256
      %27 = vsyncadd [#allocation6], %s26
      %s28 = sshll.u32 [#allocation5], 4
      %s29 = int_to_ptr.vmem [resolvable:$true] %s28
      %34 = dma.hbm_to_vmem [thread:$0]  %s1, 256, %s29, [#allocation6], 128, 128, 8
    $region9: #{tpu_custom_call.1} parent=1 // pred_fallthru
      _
    // Predicated region
    $region10: #{tpu_custom_call.1} parent=1 // pred_check
      _
    $region11: #{tpu_custom_call.1} parent=1 // pred_check_branch
      %36 = sbr.rel (0) target = $region13
    $region12: #{tpu_custom_call.1} parent=1 // pred_region
      _
    $region13: #{tpu_custom_call.1} parent=1 // pred_fallthru
      _
    // Predicated region
    $region14: #{tpu_custom_call.1} parent=1 // pred_check
      _
    $region15: #{tpu_custom_call.1} parent=1 // pred_check_branch
      %38 = sbr.rel (0) target = $region17
    $region16: #{tpu_custom_call.1} parent=1 // pred_region
      %39 = dma.done [#allocation3], 32
    $region17: #{tpu_custom_call.1} parent=1 // pred_fallthru
      _
    // Predicated region
    $region18: #{tpu_custom_call.1} parent=1 // pred_check
      _
    $region19: #{tpu_custom_call.1} parent=1 // pred_check_branch
      %41 = sbr.rel (0) target = $region21
    $region20: #{tpu_custom_call.1} parent=1 // pred_region
      %42 = dma.done [#allocation6], 256
    $region21: #{tpu_custom_call.1} parent=1 // pred_fallthru
      _
    %v43 = vld [vmem:[#allocation2] sm:$0x1]
    %v44 = vld [vmem:[#allocation2 + $0x1] sm:$0x1]
    %v45 = vld [vmem:[#allocation5] sm:$0xff]
    %v46 = vld [vmem:[#allocation5 + $0x8] sm:$0xff]
    %v47 = vld [vmem:[%s2] sm:$0x1]
    %v49 = vlaneseq
    %v50 = vshrl.u32 %v49, 7
    %v51 = vsub.s32 0, %v50
    %v52 = vrot.slane %v47, %v51
    %v56 = vcombine.low %v43, %v44
    %v58 = vunpack.c.l.s4 1966171168
    %v59 = vunpack.c.0.s8 %v58
    %v60 = vlaneseq
    %v61 = vshrl.u32 %v60, 7
    %v62 = vsub.s32 %v59, %v61
    %v63 = vrot.slane %v56, %v62
    %v65 = vunpack.c.l.s4 1966171168
    %v66 = vunpack.c.0.s8 %v65
    %v67 = vlaneseq
    %v68 = vshrl.u32 %v67, 7
    %v69 = vsub.s32 %v66, %v68
    %v70 = vrot.slane %v63, %v69
    %vm71 = vcmask 130048
    %v72 = vsel %vm71, %v70, 0
    %74 = vmatprep.subr.mxu0 0.0
    %75 = vmatpush1.msra.mxu0 %v45
    %76 = vmatprep.subr.mxu0 0.0
    %77 = vmatpush1.msra.mxu0 %v46
    %78 = vmatprep.subr.mxu0 0.0
    %79 = vmatpush1.msra.mxu0 0.0
    %80 = vmatprep.subr.mxu0 0.0
    %81 = vmatpush1.msra.mxu0 0.0
    %82 = vmatprep.subr.mxu0 0.0
    %83 = vmatpush1.msra.mxu0 0.0
    %84 = vmatprep.subr.mxu0 0.0
    %85 = vmatpush1.msra.mxu0 0.0
    %86 = vmatprep.subr.mxu0 0.0
    %87 = vmatpush1.msra.mxu0 0.0
    %88 = vmatprep.subr.mxu0 0.0
    %89 = vmatpush1.msra.mxu0 0.0
    %90 = vmatprep.subr.mxu0 0.0
    %91 = vmatpush1.msra.mxu0 0.0
    %92 = vmatprep.subr.mxu0 0.0
    %93 = vmatpush1.msra.mxu0 0.0
    %94 = vmatprep.subr.mxu0 0.0
    %95 = vmatpush1.msra.mxu0 0.0
    %96 = vmatprep.subr.mxu0 0.0
    %97 = vmatpush1.msra.mxu0 0.0
    %98 = vmatprep.subr.mxu0 0.0
    %99 = vmatpush1.msra.mxu0 0.0
    %100 = vmatprep.subr.mxu0 0.0
    %101 = vmatpush1.msra.mxu0 0.0
    %102 = vmatprep.subr.mxu0 0.0
    %103 = vmatpush1.msra.mxu0 0.0
    %104 = vmatprep.subr.mxu0 0.0
    %105 = vmatpush1.msra.mxu0 0.0
    %106 = vmatprep.subr.mxu0 0.0
    %107 = vmatpush1.msra.mxu0 0.0
    %108 = vmatprep.subr.mxu0 0.0
    %109 = vmatpush1.msra.mxu0 0.0
    %110 = vmatprep.subr.mxu0 0.0
    %111 = vmatpush1.msra.mxu0 0.0
    %112 = vmatprep.subr.mxu0 0.0
    %113 = vmatpush1.msra.mxu0 0.0
    %114 = vmatprep.subr.mxu0 0.0
    %115 = vmatpush1.msra.mxu0 0.0
    %116 = vmatprep.subr.mxu0 0.0
    %117 = vmatpush1.msra.mxu0 0.0
    %118 = vmatprep.subr.mxu0 0.0
    %119 = vmatpush1.msra.mxu0 0.0
    %120 = vmatprep.subr.mxu0 0.0
    %121 = vmatpush1.msra.mxu0 0.0
    %122 = vmatprep.subr.mxu0 0.0
    %123 = vmatpush1.msra.mxu0 0.0
    %124 = vmatprep.subr.mxu0 0.0
    %125 = vmatpush1.msra.mxu0 0.0
    %126 = vmatprep.subr.mxu0 0.0
    %127 = vmatpush1.msra.mxu0 0.0
    %128 = vmatprep.subr.mxu0 0.0
    %129 = vmatpush1.msra.mxu0 0.0
    %130 = vmatprep.subr.mxu0 0.0
    %131 = vmatpush1.msra.mxu0 0.0
    %132 = vmatprep.subr.mxu0 0.0
    %133 = vmatpush1.msra.mxu0 0.0
    %134 = vmatprep.subr.mxu0 0.0
    %135 = vmatpush1.msra.mxu0 0.0
    %136 = vmatprep.subr.mxu0 0.0
    %137 = vmatpush1.msra.mxu0 0.0
    %138 = vmatprep.mubr.f32.mxu0 0.0
    %139 = vmatmul.mubr.f32.gmra.mrb[0].mxu0 %v72
    %v140 = vpop.f32.mrb[0].mxu0
    %v141 = vadd.f32 %v52, %v140
    %v142 = vpop.f32.mrb[0].mxu0
    %143 = vdwg.mxu0
    %v146 = vunpack.c.l.s4 1966171168
    %v147 = vunpack.c.0.s8 %v146
    %v148 = vlaneseq
    %v149 = vshrl.u32 %v148, 7
    %v150 = vsub.s32 %v147, %v149
    %v151 = vrot.slane %v141, %v150
    %v152 = vcombine.high %v151, %v151
    %v154 = vunpack.c.l.s4 1966171168
    %v155 = vunpack.c.0.s8 %v154
    %v156 = vlaneseq
    %v157 = vshrl.u32 %v156, 7
    %v158 = vsub.s32 %v155, %v157
    %v159 = vrot.slane %v151, %v158
    %v161 = vunpack.c.l.s4 1966171168
    %v162 = vunpack.c.0.s8 %v161
    %v163 = vlaneseq
    %v164 = vshrl.u32 %v163, 7
    %v165 = vsub.s32 %v162, %v164
    %v166 = vrot.slane %v152, %v165
    %169 = vst [vmem:[#allocation7] sm:$0x1] %v159
    %170 = vst [vmem:[#allocation7 + $0x1] sm:$0x1] %v166
    // Predicated region
    $region22: #{tpu_custom_call.1} parent=1 // pred_check
      _
    $region23: #{tpu_custom_call.1} parent=1 // pred_check_branch
      %172 = sbr.rel (0) target = $region25
    $region24: #{tpu_custom_call.1} parent=1 // pred_region
      %s174 = ssub.s32 32, 32
      %175 = vsyncadd [#allocation4], %s174
      %s176 = sshll.u32 [#allocation7], 4
      %s177 = int_to_ptr.vmem [resolvable:$true] %s176
      %182 = dma.vmem_to_hbm [thread:$0]  %s177, 32, %s3, [#allocation4], 16, 16, 1
    $region25: #{tpu_custom_call.1} parent=1 // pred_fallthru
      _
    // Predicated region
    $region26: #{tpu_custom_call.1} parent=1 // pred_check
      _
    $region27: #{tpu_custom_call.1} parent=1 // pred_check_branch
      %184 = sbr.rel (0) target = $region29
    $region28: #{tpu_custom_call.1} parent=1 // pred_region
      %185 = dma.done [#allocation4], 32
    $region29: #{tpu_custom_call.1} parent=1 // pred_fallthru
      _
    %186 = vsyncpa [#allocation3], 1
    %187 = vsyncpa [#allocation6], 1
    %188 = vsyncpa [#allocation4], 1

</llo_original>
